<compile_context>
chip_gen: v7x
topology: tpu7x:2x2x1
jax: 0.10.0
libtpu: 0.0.40
codegen_flags: <defaults>
</compile_context>

<pallas_src>
import functools

import jax
import jax.numpy as jnp
from jax.experimental import pallas as pl
from jax.experimental.pallas import tpu as pltpu


def _cdiv(a, b):
    return -(-a // b)


def _round_up(x, m):
    return ((x + m - 1) // m) * m


def _device_defaults():
    """(num_partials, target_block_bytes) based on the TPU generation."""
    try:
        kind = jax.devices()[0].device_kind.lower()
    except Exception:
        kind = ""
    if "v7" in kind or "7x" in kind:
        # 2 TensorCores per chip -> split the reduction across cores; bigger
        # blocks because the fixed per-step overhead is a larger fraction of
        # the (faster) per-block DMA time.
        return 2, 4 << 20
    # v5e / v6e: single TensorCore -> no partial split, ~2 MiB blocks.
    return 1, 2 << 20


def _choose_cols(n):
    """Largest cols in {1024,512,256,128} that divides n with n//cols >= 8."""
    for cols in (1024, 512, 256, 128):
        if n % cols == 0 and n // cols >= 8:
            return cols
    return None


def _agree_loss_kernel(pos_ref, neg_ref, out_ref, *, rows, tile_rows,
                       blocks_per_part):
    p = pl.program_id(0)   # partial index ("parallel", sharded on v7x)
    j = pl.program_id(1)   # reduction axis (last, "arbitrary")

    @pl.when(j == 0)
    def _init():
        out_ref[...] = jnp.zeros_like(out_ref)

    # Stream native dtype, compute in f32.
    d = pos_ref[...].astype(jnp.float32) - neg_ref[...].astype(jnp.float32) - 1.0
    sq = d * d

    # Mask rows past the true row count: handles the ragged last block and
    # any redundant (clamped) block when the partial split is uneven.
    base = (p * blocks_per_part + j) * tile_rows
    row_id = base + jax.lax.broadcasted_iota(jnp.int32, sq.shape, 0)
    sq = jnp.where(row_id < rows, sq, 0.0)

    # (tile_rows, cols) -> (8, cols): pure-VPU tree add (no XLU per step),
    # accumulated directly into the resident output block.
    cols = sq.shape[-1]
    out_ref[...] += sq.reshape(tile_rows // 8, 8, cols).sum(axis=0)


def _agree_partial_sums(pos2d, neg2d, rows, cols, tile_rows, num_partials,
                        vmem_limit):
    nblocks = _cdiv(rows, tile_rows)
    num_partials = max(1, min(num_partials, nblocks))
    bpp = _cdiv(nblocks, num_partials)

    if num_partials * bpp == nblocks:
        def in_idx(p, j):
            return (p * bpp + j, 0)
    else:
        # Uneven split: clamp the block index (the redundant block is fully
        # masked inside the kernel via its *logical* row offset).
        def in_idx(p, j):
            return (jnp.minimum(p * bpp + j, nblocks - 1), 0)

    kernel = functools.partial(_agree_loss_kernel, rows=rows,
                               tile_rows=tile_rows, blocks_per_part=bpp)

    return pl.pallas_call(
        kernel,
        out_shape=jax.ShapeDtypeStruct((num_partials * 8, cols), jnp.float32),
        grid_spec=pltpu.PrefetchScalarGridSpec(
            num_scalar_prefetch=0,
            grid=(num_partials, bpp),
            in_specs=[
                pl.BlockSpec((tile_rows, cols), in_idx),
                pl.BlockSpec((tile_rows, cols), in_idx),
            ],
            out_specs=pl.BlockSpec((8, cols), lambda p, j: (p, 0)),
        ),
        compiler_params=pltpu.CompilerParams(
            dimension_semantics=("parallel", "arbitrary"),
            vmem_limit_bytes=vmem_limit,
        ),
    )(pos2d, neg2d)


def agree_loss(pos_preds, neg_preds, *, num_partials=None,
               target_block_bytes=None):
    """Pallas TPU implementation of mean((pos_preds - neg_preds - 1)**2)."""
    assert pos_preds.shape == neg_preds.shape
    n = int(pos_preds.size)
    out_dtype = jnp.result_type(pos_preds.dtype, neg_preds.dtype)
    if not jnp.issubdtype(out_dtype, jnp.floating):
        out_dtype = jnp.float32

    auto_parts, auto_blk = _device_defaults()
    if num_partials is None:
        num_partials = auto_parts
    if target_block_bytes is None:
        target_block_bytes = auto_blk

    pos = pos_preds.reshape(-1)
    neg = neg_preds.reshape(-1)

    cols = _choose_cols(n)
    if cols is None:
        # Rare fallback: n is not a multiple of 128 (or is tiny).  Pad by
        # < 1024 elements: pos with 1, neg with 0 so padded elements
        # contribute (1 - 0 - 1)^2 == 0; divide by the true n at the end.
        # TODO(synk): for very large ragged n, replace this full-copy pad
        # with an in-kernel manual-DMA tail path to avoid the extra HBM pass.
        n_pad = _round_up(max(n, 1024), 1024)
        pos = jnp.pad(pos, (0, n_pad - n), constant_values=1)
        neg = jnp.pad(neg, (0, n_pad - n), constant_values=0)
        cols = _choose_cols(n_pad)

    rows = pos.size // cols
    pos2d = pos.reshape(rows, cols)
    neg2d = neg.reshape(rows, cols)

    # Byte-based tile sizing in the native dtype, rounded to the packed
    # sublane count (8 for 32-bit, 16 for 16-bit, 32 for 8-bit dtypes).
    isz_pos = jnp.dtype(pos_preds.dtype).itemsize
    isz_neg = jnp.dtype(neg_preds.dtype).itemsize
    itemsize = max(isz_pos, isz_neg)
    sub = 8 * max(1, 4 // itemsize)
    if rows < sub:
        sub = 8
    tile_rows = (target_block_bytes // (cols * itemsize)) // sub * sub
    tile_rows = max(sub, min(tile_rows, (rows // sub) * sub))

    # VMEM budget: 2 inputs x 2 pipeline buffers x native-dtype block
    # + double-buffered (8, cols) f32 output block + headroom.
    in_block_bytes = tile_rows * cols * (isz_pos + isz_neg)
    needed = 2 * in_block_bytes + 2 * 8 * cols * 4
    vmem_limit = int(min(40 << 20, max(16 << 20, needed + (8 << 20))))

    partials = _agree_partial_sums(pos2d, neg2d, rows, cols, tile_rows,
                                   num_partials, vmem_limit)

    # One tiny final cross-lane/sublane reduce + divide by the true count.
    return (jnp.sum(partials) / n).astype(out_dtype)


if __name__ == "__main__":
    key = jax.random.PRNGKey(0)
    k1, k2 = jax.random.split(key)

    loss_fn = jax.jit(agree_loss)

    # Small example consistent with the module: (batch=16, dim=128) preds.
    pos_preds = jax.random.normal(k1, (16, 128), dtype=jnp.float32)
    neg_preds = jax.random.normal(k2, (16, 128), dtype=jnp.float32)
    loss = jax.block_until_ready(loss_fn(pos_preds, neg_preds))
    ref = jnp.mean((pos_preds - neg_preds - 1.0) ** 2)
    assert jnp.allclose(loss, ref, rtol=1e-5, atol=1e-5), (loss, ref)

    # Ragged shape (n % 128 != 0) exercises the masked / fallback path.
    k3, k4 = jax.random.split(k1)
    pos2 = jax.random.normal(k3, (7, 33), dtype=jnp.float32)
    neg2 = jax.random.normal(k4, (7, 33), dtype=jnp.float32)
    loss2 = jax.block_until_ready(loss_fn(pos2, neg2))
    ref2 = jnp.mean((pos2 - neg2 - 1.0) ** 2)
    assert jnp.allclose(loss2, ref2, rtol=1e-5, atol=1e-5), (loss2, ref2)

    print("KERNEL_OK")
</pallas_src>

<mosaic_0001>
module attributes {stable_mosaic.version = 11 : i64} {
  func.func @_agree_loss_kernel(%arg0: i32, %arg1: i32, %arg2: memref<8x256xf32, #tpu.memory_space<vmem>>, %arg3: memref<8x256xf32, #tpu.memory_space<vmem>>, %arg4: memref<8x256xf32, #tpu.memory_space<vmem>>) attributes {dimension_semantics = [#tpu.dimension_semantics<parallel>, #tpu.dimension_semantics<arbitrary>], iteration_bounds = array<i64: 1, 1>, scalar_prefetch = 0 : i64, scratch_operands = 0 : i64, tpu.core_type = #tpu.core_type<tc>, window_params = [{transform_indices = @transform_0, window_bounds = array<i64: 8, 256>}, {transform_indices = @transform_1, window_bounds = array<i64: 8, 256>}, {transform_indices = @transform_2, window_bounds = array<i64: 8, 256>}]} {
    %c0_i32 = arith.constant 0 : i32
    %0 = arith.cmpi eq, %arg1, %c0_i32 : i32
    %1 = arith.extui %0 : i1 to i32
    %c0_i32_0 = arith.constant 0 : i32
    %2 = arith.cmpi ne, %1, %c0_i32_0 : i32
    scf.if %2 {
      %cst_11 = arith.constant 0.000000e+00 : f32
      %24 = vector.broadcast %cst_11 : f32 to vector<8x256xf32>
      %c0_12 = arith.constant 0 : index
      %c0_13 = arith.constant 0 : index
      %25 = vector.load %arg4[%c0_12, %c0_13] : memref<8x256xf32, #tpu.memory_space<vmem>>, vector<8x256xf32>
      tpu.vector_store %arg4[%c0_12, %c0_13], %24 {strides = array<i32>} : memref<8x256xf32, #tpu.memory_space<vmem>>, vector<8x256xf32>,
    } else {
    }
    %c0 = arith.constant 0 : index
    %c0_1 = arith.constant 0 : index
    %3 = vector.load %arg2[%c0, %c0_1] : memref<8x256xf32, #tpu.memory_space<vmem>>, vector<8x256xf32>
    %c0_2 = arith.constant 0 : index
    %c0_3 = arith.constant 0 : index
    %4 = vector.load %arg3[%c0_2, %c0_3] : memref<8x256xf32, #tpu.memory_space<vmem>>, vector<8x256xf32>
    %5 = arith.subf %3, %4 : vector<8x256xf32>
    %cst = arith.constant 1.000000e+00 : f32
    %6 = vector.broadcast %cst : f32 to vector<8x256xf32>
    %7 = arith.subf %5, %6 : vector<8x256xf32>
    %8 = arith.mulf %7, %7 : vector<8x256xf32>
    %c1_i32 = arith.constant 1 : i32
    %9 = arith.muli %arg0, %c1_i32 : i32
    %10 = arith.addi %9, %arg1 : i32
    %c8_i32 = arith.constant 8 : i32
    %11 = arith.muli %10, %c8_i32 : i32
    %12 = tpu.iota {dimensions = array<i32: 0>} : vector<8x256xi32>
    %13 = vector.broadcast %11 : i32 to vector<8x256xi32>
    %14 = arith.addi %13, %12 : vector<8x256xi32>
    %c8_i32_4 = arith.constant 8 : i32
    %15 = vector.broadcast %c8_i32_4 : i32 to vector<8x256xi32>
    %16 = arith.cmpi slt, %14, %15 : vector<8x256xi32>
    %cst_5 = arith.constant 0.000000e+00 : f32
    %17 = vector.broadcast %cst_5 : f32 to vector<8x256xf32>
    %18 = arith.select %16, %8, %17 : vector<8x256xi1>, vector<8x256xf32>
    %c0_6 = arith.constant 0 : index
    %c0_7 = arith.constant 0 : index
    %19 = vector.load %arg4[%c0_6, %c0_7] : memref<8x256xf32, #tpu.memory_space<vmem>>, vector<8x256xf32>
    %20 = vector.shape_cast %18 : vector<8x256xf32> to vector<1x8x256xf32>
    %cst_8 = arith.constant dense<0.000000e+00> : vector<8x256xf32>
    %21 = vector.multi_reduction <add>, %20, %cst_8 [0] : vector<1x8x256xf32> to vector<8x256xf32>
    %22 = arith.addf %19, %21 : vector<8x256xf32>
    %c0_9 = arith.constant 0 : index
    %c0_10 = arith.constant 0 : index
    %23 = vector.load %arg4[%c0_9, %c0_10] : memref<8x256xf32, #tpu.memory_space<vmem>>, vector<8x256xf32>
    tpu.vector_store %arg4[%c0_9, %c0_10], %22 {strides = array<i32>} : memref<8x256xf32, #tpu.memory_space<vmem>>, vector<8x256xf32>,
    return
  }
  func.func @transform_0(%arg0: i32, %arg1: i32) -> (i32, i32) {
    %c1_i32 = arith.constant 1 : i32
    %0 = arith.muli %arg0, %c1_i32 : i32
    %1 = arith.addi %0, %arg1 : i32
    %c0_i32 = arith.constant 0 : i32
    %c0_i32_0 = arith.constant 0 : i32
    return %1, %c0_i32 : i32, i32
  }
  func.func @transform_1(%arg0: i32, %arg1: i32) -> (i32, i32) {
    %c1_i32 = arith.constant 1 : i32
    %0 = arith.muli %arg0, %c1_i32 : i32
    %1 = arith.addi %0, %arg1 : i32
    %c0_i32 = arith.constant 0 : i32
    %c0_i32_0 = arith.constant 0 : i32
    return %1, %c0_i32 : i32, i32
  }
  func.func @transform_2(%arg0: i32, %arg1: i32) -> (i32, i32) {
    %c0_i32 = arith.constant 0 : i32
    %c0_i32_0 = arith.constant 0 : i32
    return %arg0, %c0_i32 : i32, i32
  }
}

</mosaic_0001>

<llo_original>
// kernel: agree_loss.1
$region0: #{agree_loss.1}
  #allocation0 [shape = 'u32[]', space=smem, size = 0x4, offset = 0x4, fixed_abs, tag = 'smem constant byte address 0x4 - core index']
  #allocation1 [shape = 'u32[144,128]{1,0:T(1,128)}', space=vmem, size = 0x12000, scoped, tag = 'internal scratch']
  %s0 = inlined_call_operand.vmem [shape: f32[8,256], index: 0, kind: input, shape index: {}]
  %s1 = inlined_call_operand.vmem [shape: f32[8,256], index: 1, kind: input, shape index: {}]
  %s2 = inlined_call_operand.vmem [shape: f32[8,256], index: 2, kind: output, shape index: {}]
  %s3 = sld [smem:[#allocation0]]
  $region22: #{agree_loss.1} parent=0
    _
  %s5 = ssub.s32 1, %s3
  %s6 = scalar_select 0, %s5, %s3
  // Predicated region
  $region2: #{agree_loss.1} parent=0 // pred_check
    _
  $region3: #{agree_loss.1} parent=0 // pred_check_branch
    %8 = sbr.rel (0) target = $region5
  $region4: #{agree_loss.1} parent=0 // pred_region
    %s9 = sadd.s32 0, 0
    %p10 = scmp.lt.s32.totalorder %s9, 0
    %s11 = scalar_select %p10, %s9, 0
    %s12 = smul.addr %s11, 2
    %s13 = smul.addr %s12, 8
    %s14 = scalar_lea.vmem %s0, %s13
    %s15 = sadd.s32 0, 0
  $region5: #{agree_loss.1} parent=0 // pred_fallthru
    _
  // Predicated region
  $region6: #{agree_loss.1} parent=0 // pred_check
    _
  $region7: #{agree_loss.1} parent=0 // pred_check_branch
    %17 = sbr.rel (0) target = $region9
  $region8: #{agree_loss.1} parent=0 // pred_region
    %s18 = sadd.s32 0, 0
    %p19 = scmp.lt.s32.totalorder %s18, 0
    %s20 = scalar_select %p19, %s18, 0
    %s21 = smul.addr %s20, 2
    %s22 = smul.addr %s21, 8
    %s23 = scalar_lea.vmem %s1, %s22
    %s24 = sadd.s32 0, 0
  $region9: #{agree_loss.1} parent=0 // pred_fallthru
    _
  %s25 = sadd.s32 0, 0
  %p26 = scmp.lt.s32.totalorder %s25, 0
  %s27 = scalar_select %p26, %s25, 0
  %s28 = smul.addr %s27, 2
  %s29 = smul.addr %s28, 8
  %s30 = scalar_lea.vmem %s0, %s29
  %s31 = sadd.s32 0, 0
  %p32 = scmp.lt.s32.totalorder %s31, 0
  %s33 = scalar_select %p32, %s31, 0
  %s34 = smul.addr %s33, 2
  %s35 = smul.addr %s34, 8
  %s36 = scalar_lea.vmem %s1, %s35
  %s37 = sadd.s32 0, 0
  %p38 = scmp.lt.s32.totalorder %s37, 0
  %s39 = scalar_select %p38, %s37, 0
  %s40 = smul.addr %s39, 2
  %s41 = smul.addr %s40, 8
  %s42 = scalar_lea.vmem %s0, %s41
  %s43 = sadd.s32 0, 0
  %s44 = sadd.s32 0, 0
  %p45 = scmp.lt.s32.totalorder %s44, 0
  %s46 = scalar_select %p45, %s44, 0
  %s47 = smul.addr %s46, 2
  %s48 = smul.addr %s47, 8
  %s49 = scalar_lea.vmem %s1, %s48
  %s50 = sadd.s32 0, 0
  %p51 = scmp.eq.s32.totalorder 0, 0
  // Predicated region
  $region10: #{agree_loss.1} parent=0 // pred_check
    %p52 = pneg %p51
  $region11: #{agree_loss.1} parent=0 // pred_check_branch
    %54 = sbr.rel (%p52) target = $region13
  $region12: #{agree_loss.1} parent=0 // pred_region
    %55 = vst [vmem:[%s2] sm:$0xff] 0.0
    %56 = vst [vmem:[%s2 + $0x8] sm:$0xff] 0.0
  $region13: #{agree_loss.1} parent=0 // pred_fallthru
    _
  %v57 = vld [vmem:[%s42] sm:$0xff]
  %v58 = vld [vmem:[%s42 + $0x8] sm:$0xff]
  %v59 = vld [vmem:[%s49] sm:$0xff]
  %v60 = vld [vmem:[%s49 + $0x8] sm:$0xff]
  %v61 = vsub.f32 %v57, %v59
  %v62 = vsub.f32 %v58, %v60
  %v63 = vsub.f32 %v61, 1.0
  %v64 = vsub.f32 %v62, 1.0
  %v65 = vmul.f32 %v63, %v63
  %v66 = vmul.f32 %v64, %v64
  %s67 = sadd.s32 0, 0
  %s68 = smul.u32 %s67, 8
  %v69 = vlaneseq
  %v70 = vshrl.u32 %v69, 7
  %v71 = vstv %s68
  %v72 = vadd.s32 %v71, %v70
  %vm73 = vcmp.lt.s32.totalorder %v72, 8
  %v74 = vsel %vm73, %v65, 0.0
  %v75 = vsel %vm73, %v66, 0.0
  %v76 = vld [vmem:[%s2] sm:$0xff]
  %v77 = vld [vmem:[%s2 + $0x8] sm:$0xff]
  %v78 = vadd.f32 %v74, 0.0
  %v79 = vadd.f32 %v75, 0.0
  %v80 = vadd.f32 %v76, %v78
  %v81 = vadd.f32 %v77, %v79
  %82 = vst [vmem:[%s2] sm:$0xff] %v80
  %83 = vst [vmem:[%s2 + $0x8] sm:$0xff] %v81
  // Predicated region
  $region14: #{agree_loss.1} parent=0 // pred_check
    _
  $region15: #{agree_loss.1} parent=0 // pred_check_branch
    %85 = sbr.rel (0) target = $region17
  $region16: #{agree_loss.1} parent=0 // pred_region
    _
  $region17: #{agree_loss.1} parent=0 // pred_fallthru
    _
  // Predicated region
  $region18: #{agree_loss.1} parent=0 // pred_check
    _
  $region19: #{agree_loss.1} parent=0 // pred_check_branch
    %87 = sbr.rel (0) target = $region21
  $region20: #{agree_loss.1} parent=0 // pred_region
    _
  $region21: #{agree_loss.1} parent=0 // pred_fallthru
    _

</llo_original>
